<compile_context>
chip_gen: v6e
topology: v6e:2x2x1
jax: 0.10.0
libtpu: 0.0.40
codegen_flags: <defaults>
</compile_context>

<pallas_src>
import jax
import jax.numpy as jnp
from jax.experimental import pallas as pl
from jax.experimental.pallas import tpu as pltpu

# ----------------------------- feature config ------------------------------
NUM_DENSE = 5          # dense_feas
NUM_SPARSE = 15        # sparse_feas_user + sparse_feas_job + sparse_feas_match
NUM_VEC = 16           # vec_feas
EMBED_DIM = 8
VOCAB = 12             # synthetic vocab size per sparse feature
FEA_NUM = NUM_DENSE + NUM_SPARSE * EMBED_DIM + NUM_VEC   # 5 + 120 + 16 = 141
HIDDEN_UNITS = [64, 32]                                   # dnn hidden layers
H0, H1 = HIDDEN_UNITS

# Packed-weight column layout (padded to 128 lanes for one clean MXU pass):
#   cols [0, 64)   : d0_w   (first DNN layer)
#   cols [64, 72)  : fm_w2  (FM latent factors)
#   cols [72, 73)  : fm_w1  (FM first order)
#   cols [73, 128) : zero padding
PACK_N = 128
COL_H0 = 0
COL_W2 = H0
COL_W1 = H0 + EMBED_DIM


def _round_up(n, m):
    return (n + m - 1) // m * m


# ------------------------------ Pallas kernel ------------------------------
def deepfm_kernel(x_ref, pw_ref, w2sq_ref, d0b_ref, d1w_ref, d1b_ref,
                  fw_row_ref, bias_ref, out_ref):
    # x may be streamed as bf16 (halves HBM bytes); upcast once, keep all math f32.
    x = x_ref[...].astype(jnp.float32)                       # [T, 141]
    x2 = x * x

    # One fused MXU pass covers x@d0_w, x@fm_w2 and x@fm_w1.
    z = jnp.dot(x, pw_ref[...], preferred_element_type=jnp.float32)          # [T, 128]
    # Second (small) MXU pass for the FM "sum of squares" term.
    x2w2sq = jnp.dot(x2, w2sq_ref[...], preferred_element_type=jnp.float32)  # [T, 8]

    # ---- FM (wide part) ----
    first = z[:, COL_W1:COL_W1 + 1]                           # x @ w1        [T, 1]
    xw2 = z[:, COL_W2:COL_W2 + EMBED_DIM]                     # x @ w2        [T, 8]
    second = 0.5 * jnp.sum(xw2 * xw2 - x2w2sq, axis=-1, keepdims=True)

    # ---- DNN (deep part) ----  (dropout = 0.0 -> identity)
    h0 = jnp.maximum(z[:, COL_H0:COL_H0 + H0] + d0b_ref[...], 0.0)           # [T, 64]
    h1 = jnp.dot(h0, d1w_ref[...], preferred_element_type=jnp.float32) + d1b_ref[...]
    h1 = jnp.maximum(h1, 0.0)                                                # [T, 32]
    # N=1 final matmul replaced by a VPU multiply + lane (XLU) reduction.
    deep = jnp.sum(h1 * fw_row_ref[...], axis=-1, keepdims=True)             # [T, 1]

    # bias = fm_w0 + final linear bias.
    # TODO(synk): if the masked 1-lane store ever shows on the critical path,
    #             emit a lane-dense [1, T] output and reshape in the wrapper.
    out_ref[...] = first + second + deep + bias_ref[...]


def deepfm_pallas(x_feat, params, *, tile_b=1024, x_dtype=jnp.float32):
    """x_feat: [B, FEA_NUM] float32 assembled feature matrix."""
    B = x_feat.shape[0]
    # Clamp tile to the (16-aligned) batch so tiny batches stay a single tile;
    # large batches get 1K-row pipelined tiles (~0.6 MiB/tile double-buffered,
    # well under VMEM on v5e/v6e/v7x).
    tile_b = max(16, min(tile_b, _round_up(B, 16)))
    tile_b = _round_up(tile_b, 16)
    Bp = _round_up(B, tile_b)
    grid = (Bp // tile_b,)

    x = x_feat.astype(x_dtype)
    if Bp != B:
        x = jnp.pad(x, ((0, Bp - B), (0, 0)))

    # ---- pack the tiny weights once per call (outside the kernel) ----
    pw = jnp.concatenate(
        [params["d0_w"], params["fm_w2"], params["fm_w1"],
         jnp.zeros((FEA_NUM, PACK_N - (H0 + EMBED_DIM + 1)), jnp.float32)],
        axis=1)                                            # [141, 128]
    w2sq = params["fm_w2"] * params["fm_w2"]               # [141, 8]
    fw_row = params["f_w"].T                               # [1, 32]
    bias = params["fm_w0"] + params["f_b"]                 # [1, 1]

    weights = (pw, w2sq, params["d0_b"], params["d1_w"], params["d1_b"],
               fw_row, bias)

    def const_spec(w):
        # Constant index_map -> block never changes -> weight stays VMEM-resident.
        return pl.BlockSpec(w.shape, lambda i: (0, 0))

    flops_per_row = (2 * FEA_NUM * PACK_N + 2 * FEA_NUM * EMBED_DIM
                     + 2 * H0 * H1 + 2 * H1 + 4 * EMBED_DIM + 8)
    cost = pl.CostEstimate(
        flops=int(Bp) * int(flops_per_row),
        transcendentals=0,
        bytes_accessed=int(Bp * FEA_NUM * x.dtype.itemsize) + int(Bp * 4)
        + int(sum(w.size * 4 for w in weights)),
    )

    out = pl.pallas_call(
        deepfm_kernel,
        out_shape=jax.ShapeDtypeStruct((Bp, 1), jnp.float32),
        grid=grid,
        in_specs=[pl.BlockSpec((tile_b, FEA_NUM), lambda i: (i, 0))]
                 + [const_spec(w) for w in weights],
        out_specs=pl.BlockSpec((tile_b, 1), lambda i: (i, 0)),
        compiler_params=pltpu.CompilerParams(
            dimension_semantics=("parallel",)),
        cost_estimate=cost,
    )(x, *weights)
    return out[:B]


# ------------------------- parameter initialization ------------------------
def init_params(key):
    keys = jax.random.split(key, 8 + NUM_SPARSE)
    params = {}
    # embedding tables (nn.Embedding: N(0,1) init in torch; deterministic here)
    params["embed"] = [
        jax.random.normal(keys[i], (VOCAB, EMBED_DIM), jnp.float32)
        for i in range(NUM_SPARSE)
    ]
    k = NUM_SPARSE
    # FM: w0 zeros([1]), w1 rand([fea_num,1]), w2 rand([fea_num, latent_dim])
    params["fm_w0"] = jnp.zeros((1, 1), jnp.float32)
    params["fm_w1"] = jax.random.uniform(keys[k + 0], (FEA_NUM, 1), jnp.float32)
    params["fm_w2"] = jax.random.uniform(keys[k + 1], (FEA_NUM, EMBED_DIM), jnp.float32)
    # DNN linear layers (kaiming-uniform-ish scale, deterministic)
    params["d0_w"] = jax.random.uniform(keys[k + 2], (FEA_NUM, H0), jnp.float32,
                                        -1.0, 1.0) / jnp.sqrt(FEA_NUM)
    params["d0_b"] = jnp.zeros((1, H0), jnp.float32)
    params["d1_w"] = jax.random.uniform(keys[k + 3], (H0, H1), jnp.float32,
                                        -1.0, 1.0) / jnp.sqrt(H0)
    params["d1_b"] = jnp.zeros((1, H1), jnp.float32)
    params["f_w"] = jax.random.uniform(keys[k + 4], (H1, 1), jnp.float32,
                                       -1.0, 1.0) / jnp.sqrt(H1)
    params["f_b"] = jnp.zeros((1, 1), jnp.float32)
    return params


# --------------------------- feature assembly (glue) -----------------------
def assemble_features(raw_x, params):
    """raw_x: [B, NUM_DENSE + NUM_SPARSE + NUM_VEC] raw input, sparse ids as floats.
    Reproduces: embed each sparse col, concat([sparse_embeds, dense, vec])."""
    dense = raw_x[:, :NUM_DENSE]
    sparse = raw_x[:, NUM_DENSE:NUM_DENSE + NUM_SPARSE].astype(jnp.int32)
    vec = raw_x[:, NUM_DENSE + NUM_SPARSE:]
    embeds = [params["embed"][i][sparse[:, i]] for i in range(NUM_SPARSE)]
    sparse_embeds = jnp.concatenate(embeds, axis=-1)              # [B, 120]
    return jnp.concatenate([sparse_embeds, dense, vec], axis=-1)  # [B, 141]


# ----------------------------- reference (sanity) ---------------------------
def deepfm_ref(x, p):
    first = p["fm_w0"] + x @ p["fm_w1"]
    second = 0.5 * jnp.sum((x @ p["fm_w2"]) ** 2 - (x ** 2) @ (p["fm_w2"] ** 2),
                           axis=1, keepdims=True)
    h = jnp.maximum(x @ p["d0_w"] + p["d0_b"], 0.0)
    h = jnp.maximum(h @ p["d1_w"] + p["d1_b"], 0.0)
    deep = h @ p["f_w"] + p["f_b"]
    return first + second + deep


# ----------------------------------- main -----------------------------------
if __name__ == "__main__":
    key = jax.random.PRNGKey(0)
    k_param, k_dense, k_sparse, k_vec = jax.random.split(key, 4)

    params = init_params(k_param)

    B = 48
    dense_in = jax.random.normal(k_dense, (B, NUM_DENSE), jnp.float32)
    sparse_in = jax.random.randint(k_sparse, (B, NUM_SPARSE), 0, VOCAB).astype(jnp.float32)
    vec_in = jax.random.normal(k_vec, (B, NUM_VEC), jnp.float32)
    raw_x = jnp.concatenate([dense_in, sparse_in, vec_in], axis=-1)   # [B, 36]

    x_feat = assemble_features(raw_x, params)                         # [B, 141]
    ref = deepfm_ref(x_feat, params)

    # f32 streaming path; tile_b=16 exercises a multi-step (3) pipelined grid.
    out_f32 = jax.block_until_ready(deepfm_pallas(x_feat, params, tile_b=16))
    assert out_f32.shape == (B, 1)
    assert jnp.allclose(out_f32, ref, atol=2e-3, rtol=1e-3), "f32 mismatch vs reference"

    # bf16-streamed x (halves HBM traffic); compared against a bf16-quantized-x
    # f32 reference, since the kernel upcasts to f32 internally.
    out_bf16 = jax.block_until_ready(
        deepfm_pallas(x_feat, params, tile_b=16, x_dtype=jnp.bfloat16))
    ref_bf16 = deepfm_ref(x_feat.astype(jnp.bfloat16).astype(jnp.float32), params)
    assert jnp.allclose(out_bf16, ref_bf16, atol=5e-2, rtol=5e-3), "bf16 mismatch vs reference"

    print("KERNEL_OK")
</pallas_src>

<mosaic_0001>
module attributes {stable_mosaic.version = 11 : i64} {
  func.func @deepfm_kernel(%arg0: i32, %arg1: memref<16x141xf32, #tpu.memory_space<vmem>>, %arg2: memref<141x128xf32, #tpu.memory_space<vmem>>, %arg3: memref<141x8xf32, #tpu.memory_space<vmem>>, %arg4: memref<1x64xf32, #tpu.memory_space<vmem>>, %arg5: memref<64x32xf32, #tpu.memory_space<vmem>>, %arg6: memref<1x32xf32, #tpu.memory_space<vmem>>, %arg7: memref<1x32xf32, #tpu.memory_space<vmem>>, %arg8: memref<1x1xf32, #tpu.memory_space<vmem>>, %arg9: memref<16x1xf32, #tpu.memory_space<vmem>>) attributes {dimension_semantics = [#tpu.dimension_semantics<parallel>], iteration_bounds = array<i64: 3>, scalar_prefetch = 0 : i64, scratch_operands = 0 : i64, tpu.core_type = #tpu.core_type<tc>, window_params = [{transform_indices = @transform_0, window_bounds = array<i64: 16, 141>}, {pipeline_mode = #tpu.pipeline_mode<synchronous>, transform_indices = @transform_1, window_bounds = array<i64: 141, 128>}, {pipeline_mode = #tpu.pipeline_mode<synchronous>, transform_indices = @transform_2, window_bounds = array<i64: 141, 8>}, {pipeline_mode = #tpu.pipeline_mode<synchronous>, transform_indices = @transform_3, window_bounds = array<i64: 1, 64>}, {pipeline_mode = #tpu.pipeline_mode<synchronous>, transform_indices = @transform_4, window_bounds = array<i64: 64, 32>}, {pipeline_mode = #tpu.pipeline_mode<synchronous>, transform_indices = @transform_5, window_bounds = array<i64: 1, 32>}, {pipeline_mode = #tpu.pipeline_mode<synchronous>, transform_indices = @transform_6, window_bounds = array<i64: 1, 32>}, {pipeline_mode = #tpu.pipeline_mode<synchronous>, transform_indices = @transform_7, window_bounds = array<i64: 1, 1>}, {transform_indices = @transform_8, window_bounds = array<i64: 16, 1>}]} {
    %c0 = arith.constant 0 : index
    %c0_0 = arith.constant 0 : index
    %0 = vector.load %arg1[%c0, %c0_0] : memref<16x141xf32, #tpu.memory_space<vmem>>, vector<16x141xf32>
    %1 = arith.mulf %0, %0 : vector<16x141xf32>
    %c0_1 = arith.constant 0 : index
    %c0_2 = arith.constant 0 : index
    %2 = vector.load %arg2[%c0_1, %c0_2] : memref<141x128xf32, #tpu.memory_space<vmem>>, vector<141x128xf32>
    %cst = arith.constant dense<0.000000e+00> : vector<16x128xf32>
    %3 = tpu.matmul %0, %2, %cst {dimension_numbers = #tpu.dot_dimension_numbers<[1], [0], [0], [1], [0, 0, 1, 1], [], []>} : vector<16x141xf32>, vector<141x128xf32>, vector<16x128xf32> -> vector<16x128xf32>
    %c0_3 = arith.constant 0 : index
    %c0_4 = arith.constant 0 : index
    %4 = vector.load %arg3[%c0_3, %c0_4] : memref<141x8xf32, #tpu.memory_space<vmem>>, vector<141x8xf32>
    %cst_5 = arith.constant dense<0.000000e+00> : vector<16x8xf32>
    %5 = tpu.matmul %1, %4, %cst_5 {dimension_numbers = #tpu.dot_dimension_numbers<[1], [0], [0], [1], [0, 0, 1, 1], [], []>} : vector<16x141xf32>, vector<141x8xf32>, vector<16x8xf32> -> vector<16x8xf32>
    %6 = vector.extract_strided_slice %3 {offsets = [0, 72], sizes = [16, 1], strides = [1, 1]} : vector<16x128xf32> to vector<16x1xf32>
    %7 = vector.extract_strided_slice %3 {offsets = [0, 64], sizes = [16, 8], strides = [1, 1]} : vector<16x128xf32> to vector<16x8xf32>
    %8 = arith.mulf %7, %7 : vector<16x8xf32>
    %9 = arith.subf %8, %5 : vector<16x8xf32>
    %cst_6 = arith.constant dense<0.000000e+00> : vector<16xf32>
    %10 = vector.multi_reduction <add>, %9, %cst_6 [1] : vector<16x8xf32> to vector<16xf32>
    %11 = vector.shape_cast %10 : vector<16xf32> to vector<16x1xf32>
    %cst_7 = arith.constant 5.000000e-01 : f32
    %12 = vector.broadcast %cst_7 : f32 to vector<16x1xf32>
    %13 = arith.mulf %12, %11 : vector<16x1xf32>
    %14 = vector.extract_strided_slice %3 {offsets = [0, 0], sizes = [16, 64], strides = [1, 1]} : vector<16x128xf32> to vector<16x64xf32>
    %c0_8 = arith.constant 0 : index
    %c0_9 = arith.constant 0 : index
    %15 = vector.load %arg4[%c0_8, %c0_9] : memref<1x64xf32, #tpu.memory_space<vmem>>, vector<1x64xf32>
    %16 = vector.broadcast %15 : vector<1x64xf32> to vector<16x64xf32>
    %17 = arith.addf %14, %16 : vector<16x64xf32>
    %cst_10 = arith.constant 0.000000e+00 : f32
    %18 = vector.broadcast %cst_10 : f32 to vector<16x64xf32>
    %19 = arith.maximumf %17, %18 : vector<16x64xf32>
    %c0_11 = arith.constant 0 : index
    %c0_12 = arith.constant 0 : index
    %20 = vector.load %arg5[%c0_11, %c0_12] : memref<64x32xf32, #tpu.memory_space<vmem>>, vector<64x32xf32>
    %cst_13 = arith.constant dense<0.000000e+00> : vector<16x32xf32>
    %21 = tpu.matmul %19, %20, %cst_13 {dimension_numbers = #tpu.dot_dimension_numbers<[1], [0], [0], [1], [0, 0, 1, 1], [], []>} : vector<16x64xf32>, vector<64x32xf32>, vector<16x32xf32> -> vector<16x32xf32>
    %c0_14 = arith.constant 0 : index
    %c0_15 = arith.constant 0 : index
    %22 = vector.load %arg6[%c0_14, %c0_15] : memref<1x32xf32, #tpu.memory_space<vmem>>, vector<1x32xf32>
    %23 = vector.broadcast %22 : vector<1x32xf32> to vector<16x32xf32>
    %24 = arith.addf %21, %23 : vector<16x32xf32>
    %cst_16 = arith.constant 0.000000e+00 : f32
    %25 = vector.broadcast %cst_16 : f32 to vector<16x32xf32>
    %26 = arith.maximumf %24, %25 : vector<16x32xf32>
    %c0_17 = arith.constant 0 : index
    %c0_18 = arith.constant 0 : index
    %27 = vector.load %arg7[%c0_17, %c0_18] : memref<1x32xf32, #tpu.memory_space<vmem>>, vector<1x32xf32>
    %28 = vector.broadcast %27 : vector<1x32xf32> to vector<16x32xf32>
    %29 = arith.mulf %26, %28 : vector<16x32xf32>
    %cst_19 = arith.constant dense<0.000000e+00> : vector<16xf32>
    %30 = vector.multi_reduction <add>, %29, %cst_19 [1] : vector<16x32xf32> to vector<16xf32>
    %31 = vector.shape_cast %30 : vector<16xf32> to vector<16x1xf32>
    %32 = arith.addf %6, %13 : vector<16x1xf32>
    %33 = arith.addf %32, %31 : vector<16x1xf32>
    %c0_20 = arith.constant 0 : index
    %c0_21 = arith.constant 0 : index
    %34 = vector.load %arg8[%c0_20, %c0_21] : memref<1x1xf32, #tpu.memory_space<vmem>>, vector<1x1xf32>
    %35 = vector.broadcast %34 : vector<1x1xf32> to vector<16x1xf32>
    %36 = arith.addf %33, %35 : vector<16x1xf32>
    %c0_22 = arith.constant 0 : index
    %c0_23 = arith.constant 0 : index
    %37 = vector.load %arg9[%c0_22, %c0_23] : memref<16x1xf32, #tpu.memory_space<vmem>>, vector<16x1xf32>
    tpu.vector_store %arg9[%c0_22, %c0_23], %36 {strides = array<i32>} : memref<16x1xf32, #tpu.memory_space<vmem>>, vector<16x1xf32>,
    return
  }
  func.func @transform_0(%arg0: i32) -> (i32, i32) {
    %c0_i32 = arith.constant 0 : i32
    %c0_i32_0 = arith.constant 0 : i32
    return %arg0, %c0_i32 : i32, i32
  }
  func.func @transform_1(%arg0: i32) -> (i32, i32) {
    %c0_i32 = arith.constant 0 : i32
    %c0_i32_0 = arith.constant 0 : i32
    %c0_i32_1 = arith.constant 0 : i32
    return %c0_i32, %c0_i32_0 : i32, i32
  }
  func.func @transform_2(%arg0: i32) -> (i32, i32) {
    %c0_i32 = arith.constant 0 : i32
    %c0_i32_0 = arith.constant 0 : i32
    %c0_i32_1 = arith.constant 0 : i32
    return %c0_i32, %c0_i32_0 : i32, i32
  }
  func.func @transform_3(%arg0: i32) -> (i32, i32) {
    %c0_i32 = arith.constant 0 : i32
    %c0_i32_0 = arith.constant 0 : i32
    %c0_i32_1 = arith.constant 0 : i32
    return %c0_i32, %c0_i32_0 : i32, i32
  }
  func.func @transform_4(%arg0: i32) -> (i32, i32) {
    %c0_i32 = arith.constant 0 : i32
    %c0_i32_0 = arith.constant 0 : i32
    %c0_i32_1 = arith.constant 0 : i32
    return %c0_i32, %c0_i32_0 : i32, i32
  }
  func.func @transform_5(%arg0: i32) -> (i32, i32) {
    %c0_i32 = arith.constant 0 : i32
    %c0_i32_0 = arith.constant 0 : i32
    %c0_i32_1 = arith.constant 0 : i32
    return %c0_i32, %c0_i32_0 : i32, i32
  }
  func.func @transform_6(%arg0: i32) -> (i32, i32) {
    %c0_i32 = arith.constant 0 : i32
    %c0_i32_0 = arith.constant 0 : i32
    %c0_i32_1 = arith.constant 0 : i32
    return %c0_i32, %c0_i32_0 : i32, i32
  }
  func.func @transform_7(%arg0: i32) -> (i32, i32) {
    %c0_i32 = arith.constant 0 : i32
    %c0_i32_0 = arith.constant 0 : i32
    %c0_i32_1 = arith.constant 0 : i32
    return %c0_i32, %c0_i32_0 : i32, i32
  }
  func.func @transform_8(%arg0: i32) -> (i32, i32) {
    %c0_i32 = arith.constant 0 : i32
    %c0_i32_0 = arith.constant 0 : i32
    return %arg0, %c0_i32 : i32, i32
  }
}

</mosaic_0001>

<llo_original>
// kernel: tpu_custom_call.1
$region0: #{tpu_custom_call.1}
  #allocation0 [shape = 'u32[]', space=smem, size = 0x4, offset = 0x4, fixed_abs, tag = 'smem constant byte address 0x4 - core index']
  #allocation1 [shape = 'u32[144,128]{1,0:T(1,128)}', space=vmem, size = 0x12000, scoped, tag = 'internal scratch']
  #allocation2 [shape = 'f32[1,1]{1,0:T(1,128)S(1)}', space=vmem, size = 0x200, scoped, tag = 'scoped memory for tpu_custom_call.1']
  %s0 = inlined_call_operand.vmem [shape: f32[48,141], index: 0, kind: input, shape index: {}]
  %s1 = inlined_call_operand.vmem [shape: f32[141,128], index: 1, kind: input, shape index: {}]
  %s2 = inlined_call_operand.vmem [shape: f32[141,8], index: 2, kind: input, shape index: {}]
  %s3 = inlined_call_operand.vmem [shape: f32[1,64], index: 3, kind: input, shape index: {}]
  %s4 = inlined_call_operand.vmem [shape: f32[64,32], index: 4, kind: input, shape index: {}]
  %s5 = inlined_call_operand.vmem [shape: f32[1,32], index: 5, kind: input, shape index: {}]
  %s6 = inlined_call_operand.vmem [shape: f32[1,32], index: 6, kind: input, shape index: {}]
  %s7 = inlined_call_operand.<no memory space> [shape: f32[1,1], index: 7, kind: input, shape index: {}]
  %s8 = inlined_call_operand.vmem [shape: f32[48,1], index: 8, kind: output, shape index: {}]
  %s9 = sld [smem:[#allocation0]]
  $region65: #{tpu_custom_call.1} parent=0
    _
  %s11 = ssub.s32 1, %s9
  %s12 = scalar_select 0, %s11, %s9
  %v13 = vstv %s7
  %14 = vst [vmem:[#allocation2] sm:$0x1] %v13
  loop: start=0, step=1, limit=5
  $region2: #{tpu_custom_call.1} parent=0 // loop_pre_header
    _
  $region3: #{tpu_custom_call.1} parent=0 // loop_header
    %s16 = sphi 0, %s20
    %p17 = scmp.ge.s32.totalorder %s16, 5
    %s26 = sphi 0, %s28
    %s29 = sphi 0, %s26
    %s30 = sphi 0, %s29
    %s46 = sphi 0, %s30
    %s50 = sphi 0, %s50
    %s52 = sphi 0, %s50
    %s53 = sphi 0, %s52
    %s67 = sphi 0, %s53
    %s71 = sphi 0, %s71
    %s73 = sphi 0, %s71
    %s74 = sphi 0, %s73
    %s88 = sphi 0, %s74
    %s92 = sphi 0, %s92
    %s94 = sphi 0, %s92
    %s95 = sphi 0, %s94
    %s109 = sphi 0, %s95
    %s113 = sphi 0, %s113
    %s115 = sphi 0, %s113
    %s116 = sphi 0, %s115
    %s130 = sphi 0, %s116
    %s134 = sphi 0, %s134
    %s136 = sphi 0, %s134
    %s137 = sphi 0, %s136
    %s151 = sphi 0, %s137
    %s155 = sphi 0, %s155
    %s157 = sphi 0, %s155
    %s158 = sphi 0, %s157
    %s172 = sphi 0, %s158
    %s176 = sphi 0, %s176
    %s178 = sphi 0, %s176
    %s179 = sphi 0, %s178
    %s193 = sphi 0, %s179
    %s199 = sphi 0, %s201
    %s202 = sphi 0, %s199
    %s203 = sphi 0, %s202
    %s219 = sphi 0, %s203
  $region4: #{tpu_custom_call.1} parent=0 // loop_header_branch
    %19 = sbr.rel (%p17) target = $region8
  $region5: #{tpu_custom_call.1} parent=0 // loop_body
    %s21 = ssub.s32 %s16, 1
    %s22 = ssub.s32 %s16, 2
    %s23 = sadd.s32 %s16, 1
    %s24 = ssub.s32 %s16, %s23
    %p25 = scmp.eq.s32.totalorder %s24, 0
    %s27 = sadd.s32 %s26, 1
    %s28 = scalar_select %p25, %s26, %s27
    %p31 = pneg %p25
    %p32 = scmp.eq.s32.totalorder %s16, 2
    %p33 = por %p31, %p32
    %p34 = scmp.ne.s32.totalorder %s26, %s29
    %p35 = scmp.eq.s32.totalorder %s16, 0
    %p36 = por %p34, %p35
    %p37 = scmp.ne.s32.totalorder %s26, %s29
    %p38 = scmp.eq.s32.totalorder %s21, 2
    %p39 = por %p37, %p38
    %p40 = scmp.ne.s32.totalorder %s29, %s30
    %p41 = scmp.eq.s32.totalorder %s21, 0
    %p42 = por %p40, %p41
    %p43 = scmp.ne.s32.totalorder %s29, %s30
    %p44 = scmp.eq.s32.totalorder %s22, 2
    %p45 = por %p43, %p44
    %p47 = scmp.ne.s32.totalorder %s30, %s46
    %p48 = scmp.eq.s32.totalorder %s22, 0
    %p49 = por %p47, %p48
    %s51 = sadd.s32 %s50, 1
    %p54 = scmp.eq.s32.totalorder %s16, 2
    %p55 = scmp.ne.s32.totalorder %s50, %s52
    %p56 = scmp.eq.s32.totalorder %s16, 0
    %p57 = por %p55, %p56
    %p58 = scmp.ne.s32.totalorder %s50, %s52
    %p59 = scmp.eq.s32.totalorder %s21, 2
    %p60 = por %p58, %p59
    %p61 = scmp.ne.s32.totalorder %s52, %s53
    %p62 = scmp.eq.s32.totalorder %s21, 0
    %p63 = por %p61, %p62
    %p64 = scmp.ne.s32.totalorder %s52, %s53
    %p65 = scmp.eq.s32.totalorder %s22, 2
    %p66 = por %p64, %p65
    %p68 = scmp.ne.s32.totalorder %s53, %s67
    %p69 = scmp.eq.s32.totalorder %s22, 0
    %p70 = por %p68, %p69
    %s72 = sadd.s32 %s71, 1
    %p75 = scmp.eq.s32.totalorder %s16, 2
    %p76 = scmp.ne.s32.totalorder %s71, %s73
    %p77 = scmp.eq.s32.totalorder %s16, 0
    %p78 = por %p76, %p77
    %p79 = scmp.ne.s32.totalorder %s71, %s73
    %p80 = scmp.eq.s32.totalorder %s21, 2
    %p81 = por %p79, %p80
    %p82 = scmp.ne.s32.totalorder %s73, %s74
    %p83 = scmp.eq.s32.totalorder %s21, 0
    %p84 = por %p82, %p83
    %p85 = scmp.ne.s32.totalorder %s73, %s74
    %p86 = scmp.eq.s32.totalorder %s22, 2
    %p87 = por %p85, %p86
    %p89 = scmp.ne.s32.totalorder %s74, %s88
    %p90 = scmp.eq.s32.totalorder %s22, 0
    %p91 = por %p89, %p90
    %s93 = sadd.s32 %s92, 1
    %p96 = scmp.eq.s32.totalorder %s16, 2
    %p97 = scmp.ne.s32.totalorder %s92, %s94
    %p98 = scmp.eq.s32.totalorder %s16, 0
    %p99 = por %p97, %p98
    %p100 = scmp.ne.s32.totalorder %s92, %s94
    %p101 = scmp.eq.s32.totalorder %s21, 2
    %p102 = por %p100, %p101
    %p103 = scmp.ne.s32.totalorder %s94, %s95
    %p104 = scmp.eq.s32.totalorder %s21, 0
    %p105 = por %p103, %p104
    %p106 = scmp.ne.s32.totalorder %s94, %s95
    %p107 = scmp.eq.s32.totalorder %s22, 2
    %p108 = por %p106, %p107
    %p110 = scmp.ne.s32.totalorder %s95, %s109
    %p111 = scmp.eq.s32.totalorder %s22, 0
    %p112 = por %p110, %p111
    %s114 = sadd.s32 %s113, 1
    %p117 = scmp.eq.s32.totalorder %s16, 2
    %p118 = scmp.ne.s32.totalorder %s113, %s115
    %p119 = scmp.eq.s32.totalorder %s16, 0
    %p120 = por %p118, %p119
    %p121 = scmp.ne.s32.totalorder %s113, %s115
    %p122 = scmp.eq.s32.totalorder %s21, 2
    %p123 = por %p121, %p122
    %p124 = scmp.ne.s32.totalorder %s115, %s116
    %p125 = scmp.eq.s32.totalorder %s21, 0
    %p126 = por %p124, %p125
    %p127 = scmp.ne.s32.totalorder %s115, %s116
    %p128 = scmp.eq.s32.totalorder %s22, 2
    %p129 = por %p127, %p128
    %p131 = scmp.ne.s32.totalorder %s116, %s130
    %p132 = scmp.eq.s32.totalorder %s22, 0
    %p133 = por %p131, %p132
    %s135 = sadd.s32 %s134, 1
    %p138 = scmp.eq.s32.totalorder %s16, 2
    %p139 = scmp.ne.s32.totalorder %s134, %s136
    %p140 = scmp.eq.s32.totalorder %s16, 0
    %p141 = por %p139, %p140
    %p142 = scmp.ne.s32.totalorder %s134, %s136
    %p143 = scmp.eq.s32.totalorder %s21, 2
    %p144 = por %p142, %p143
    %p145 = scmp.ne.s32.totalorder %s136, %s137
    %p146 = scmp.eq.s32.totalorder %s21, 0
    %p147 = por %p145, %p146
    %p148 = scmp.ne.s32.totalorder %s136, %s137
    %p149 = scmp.eq.s32.totalorder %s22, 2
    %p150 = por %p148, %p149
    %p152 = scmp.ne.s32.totalorder %s137, %s151
    %p153 = scmp.eq.s32.totalorder %s22, 0
    %p154 = por %p152, %p153
    %s156 = sadd.s32 %s155, 1
    %p159 = scmp.eq.s32.totalorder %s16, 2
    %p160 = scmp.ne.s32.totalorder %s155, %s157
    %p161 = scmp.eq.s32.totalorder %s16, 0
    %p162 = por %p160, %p161
    %p163 = scmp.ne.s32.totalorder %s155, %s157
    %p164 = scmp.eq.s32.totalorder %s21, 2
    %p165 = por %p163, %p164
    %p166 = scmp.ne.s32.totalorder %s157, %s158
    %p167 = scmp.eq.s32.totalorder %s21, 0
    %p168 = por %p166, %p167
    %p169 = scmp.ne.s32.totalorder %s157, %s158
    %p170 = scmp.eq.s32.totalorder %s22, 2
    %p171 = por %p169, %p170
    %p173 = scmp.ne.s32.totalorder %s158, %s172
    %p174 = scmp.eq.s32.totalorder %s22, 0
    %p175 = por %p173, %p174
    %s177 = sadd.s32 %s176, 1
    %p180 = scmp.eq.s32.totalorder %s16, 2
    %p181 = scmp.ne.s32.totalorder %s176, %s178
    %p182 = scmp.eq.s32.totalorder %s16, 0
    %p183 = por %p181, %p182
    %p184 = scmp.ne.s32.totalorder %s176, %s178
    %p185 = scmp.eq.s32.totalorder %s21, 2
    %p186 = por %p184, %p185
    %p187 = scmp.ne.s32.totalorder %s178, %s179
    %p188 = scmp.eq.s32.totalorder %s21, 0
    %p189 = por %p187, %p188
    %p190 = scmp.ne.s32.totalorder %s178, %s179
    %p191 = scmp.eq.s32.totalorder %s22, 2
    %p192 = por %p190, %p191
    %p194 = scmp.ne.s32.totalorder %s179, %s193
    %p195 = scmp.eq.s32.totalorder %s22, 0
    %p196 = por %p194, %p195
    %s197 = ssub.s32 %s16, %s23
    %p198 = scmp.eq.s32.totalorder %s197, 0
    %s200 = sadd.s32 %s199, 1
    %s201 = scalar_select %p198, %s199, %s200
    %p204 = pneg %p198
    %p205 = scmp.eq.s32.totalorder %s16, 2
    %p206 = por %p204, %p205
    %p207 = scmp.ne.s32.totalorder %s199, %s202
    %p208 = scmp.eq.s32.totalorder %s16, 0
    %p209 = por %p207, %p208
    %p210 = scmp.ne.s32.totalorder %s199, %s202
    %p211 = scmp.eq.s32.totalorder %s21, 2
    %p212 = por %p210, %p211
    %p213 = scmp.ne.s32.totalorder %s202, %s203
    %p214 = scmp.eq.s32.totalorder %s21, 0
    %p215 = por %p213, %p214
    %p216 = scmp.ne.s32.totalorder %s202, %s203
    %p217 = scmp.eq.s32.totalorder %s22, 2
    %p218 = por %p216, %p217
    %p220 = scmp.ne.s32.totalorder %s203, %s219
    %p221 = scmp.eq.s32.totalorder %s22, 0
    %p222 = por %p220, %p221
    %p223 = scmp.le.s32.totalorder 1, %s16
    %p224 = scmp.lt.s32.totalorder %s16, 4
    %p225 = pnand %p223, %p224
    %p226 = pneg %p225
    // Predicated region
    $region9: #{tpu_custom_call.1} parent=5 // pred_check
      _
    $region10: #{tpu_custom_call.1} parent=5 // pred_check_branch
      %228 = sbr.rel (%p225) target = $region12
    $region11: #{tpu_custom_call.1} parent=5 // pred_region
      %s229 = ssub.s32 %s16, 1
      // Predicated region
      $region13: #{tpu_custom_call.1} parent=11 // pred_check
        %p230 = pneg %p63
      $region14: #{tpu_custom_call.1} parent=11 // pred_check_branch
        %232 = sbr.rel (%p230) target = $region16
      $region15: #{tpu_custom_call.1} parent=11 // pred_region
        _
      $region16: #{tpu_custom_call.1} parent=11 // pred_fallthru
        _
      // Predicated region
      $region17: #{tpu_custom_call.1} parent=11 // pred_check
        %p233 = pneg %p84
      $region18: #{tpu_custom_call.1} parent=11 // pred_check_branch
        %235 = sbr.rel (%p233) target = $region20
      $region19: #{tpu_custom_call.1} parent=11 // pred_region
        _
      $region20: #{tpu_custom_call.1} parent=11 // pred_fallthru
        _
      // Predicated region
      $region21: #{tpu_custom_call.1} parent=11 // pred_check
        %p236 = pneg %p105
      $region22: #{tpu_custom_call.1} parent=11 // pred_check_branch
        %238 = sbr.rel (%p236) target = $region24
      $region23: #{tpu_custom_call.1} parent=11 // pred_region
        _
      $region24: #{tpu_custom_call.1} parent=11 // pred_fallthru
        _
      // Predicated region
      $region25: #{tpu_custom_call.1} parent=11 // pred_check
        %p239 = pneg %p126
      $region26: #{tpu_custom_call.1} parent=11 // pred_check_branch
        %241 = sbr.rel (%p239) target = $region28
      $region27: #{tpu_custom_call.1} parent=11 // pred_region
        _
      $region28: #{tpu_custom_call.1} parent=11 // pred_fallthru
        _
      // Predicated region
      $region29: #{tpu_custom_call.1} parent=11 // pred_check
        %p242 = pneg %p147
      $region30: #{tpu_custom_call.1} parent=11 // pred_check_branch
        %244 = sbr.rel (%p242) target = $region32
      $region31: #{tpu_custom_call.1} parent=11 // pred_region
        _
      $region32: #{tpu_custom_call.1} parent=11 // pred_fallthru
        _
      // Predicated region
      $region33: #{tpu_custom_call.1} parent=11 // pred_check
        %p245 = pneg %p168
      $region34: #{tpu_custom_call.1} parent=11 // pred_check_branch
        %247 = sbr.rel (%p245) target = $region36
      $region35: #{tpu_custom_call.1} parent=11 // pred_region
        _
      $region36: #{tpu_custom_call.1} parent=11 // pred_fallthru
        _
      // Predicated region
      $region37: #{tpu_custom_call.1} parent=11 // pred_check
        %p248 = pneg %p189
      $region38: #{tpu_custom_call.1} parent=11 // pred_check_branch
        %250 = sbr.rel (%p248) target = $region40
      $region39: #{tpu_custom_call.1} parent=11 // pred_region
        _
      $region40: #{tpu_custom_call.1} parent=11 // pred_fallthru
        _
    $region12: #{tpu_custom_call.1} parent=5 // pred_fallthru
      _
    %p251 = scmp.lt.s32.totalorder %s16, 3
    // Predicated region
    $region41: #{tpu_custom_call.1} parent=5 // pred_check
      %p252 = pneg %p251
    $region42: #{tpu_custom_call.1} parent=5 // pred_check_branch
      %254 = sbr.rel (%p252) target = $region44
    $region43: #{tpu_custom_call.1} parent=5 // pred_region
      // Predicated region
      $region45: #{tpu_custom_call.1} parent=43 // pred_check
        %p255 = pneg %p36
      $region46: #{tpu_custom_call.1} parent=43 // pred_check_branch
        %257 = sbr.rel (%p255) target = $region48
      $region47: #{tpu_custom_call.1} parent=43 // pred_region
        %s258 = smul.u32 2, %s16
        %p259 = scmp.lt.s32.totalorder %s258, 5
        %s260 = scalar_select %p259, %s258, 5
        %s261 = smul.addr %s260, 2
        %s262 = smul.addr %s261, 8
        %s263 = scalar_lea.vmem %s0, %s262
        %s264 = smul.u32 2, %s16
      $region48: #{tpu_custom_call.1} parent=43 // pred_fallthru
        _
    $region44: #{tpu_custom_call.1} parent=5 // pred_fallthru
      _
    %p265 = scmp.le.s32.totalorder 1, %s16
    %p266 = scmp.lt.s32.totalorder %s16, 4
    %p267 = pnand %p265, %p266
    %p268 = pneg %p267
    // Predicated region
    $region49: #{tpu_custom_call.1} parent=5 // pred_check
      _
    $region50: #{tpu_custom_call.1} parent=5 // pred_check_branch
      %270 = sbr.rel (%p267) target = $region52
    $region51: #{tpu_custom_call.1} parent=5 // pred_region
      %s271 = ssub.s32 %s16, 1
      %s272 = smul.u32 2, %s21
      %p273 = scmp.lt.s32.totalorder %s272, 5
      %s274 = scalar_select %p273, %s272, 5
      %s275 = smul.addr %s274, 2
      %s276 = smul.addr %s275, 8
      %s277 = scalar_lea.vmem %s0, %s276
      %p278 = pneg %p42
      %p279 = pneg %p39
      %p280 = pneg %p63
      %p281 = pneg %p60
      %p282 = pneg %p84
      %p283 = pneg %p81
      %p284 = pneg %p105
      %p285 = pneg %p102
      %p286 = pneg %p126
      %p287 = pneg %p123
      %p288 = pneg %p147
      %p289 = pneg %p144
      %p290 = pneg %p168
      %p291 = pneg %p165
      %p292 = pneg %p189
      %p293 = pneg %p186
      %p294 = pneg %p215
      %p295 = pneg %p212
      %s296 = smul.u32 2, %s21
      %p297 = scmp.lt.s32.totalorder %s296, 5
      %s298 = scalar_select %p297, %s296, 5
      %s299 = smul.addr %s298, 8
      %s300 = scalar_lea.vmem %s8, %s299
      %s301 = smul.u32 2, %s21
      %p302 = scmp.lt.s32.totalorder %s301, 5
      %s303 = scalar_select %p302, %s301, 5
      %s304 = smul.addr %s303, 2
      %s305 = smul.addr %s304, 8
      %s306 = scalar_lea.vmem %s0, %s305
      %s307 = smul.u32 2, %s21
      %s308 = smul.u32 2, %s21
      %p309 = scmp.lt.s32.totalorder %s308, 5
      %s310 = scalar_select %p309, %s308, 5
      %s311 = smul.addr %s310, 8
      %s312 = scalar_lea.vmem %s8, %s311
      %s313 = smul.u32 2, %s21
      %v314 = vld [vmem:[%s306] sm:$0xff]
      %v315 = vld [vmem:[%s306 + $0x8] sm:$0xff]
      %v316 = vld [vmem:[%s306 + $0x10] sm:$0xff]
      %v317 = vld [vmem:[%s306 + $0x18] sm:$0xff]
      %v318 = vmul.f32 %v314, %v314
      %v319 = vmul.f32 %v315, %v315
      %v320 = vmul.f32 %v316, %v316
      %v321 = vmul.f32 %v317, %v317
      %v322 = vld [vmem:[%s1] sm:$0xff]
      %v323 = vld [vmem:[%s1 + $0x8] sm:$0xff]
      %v324 = vld [vmem:[%s1 + $0x10] sm:$0xff]
      %v325 = vld [vmem:[%s1 + $0x18] sm:$0xff]
      %v326 = vld [vmem:[%s1 + $0x20] sm:$0xff]
      %v327 = vld [vmem:[%s1 + $0x28] sm:$0xff]
      %v328 = vld [vmem:[%s1 + $0x30] sm:$0xff]
      %v329 = vld [vmem:[%s1 + $0x38] sm:$0xff]
      %v330 = vld [vmem:[%s1 + $0x40] sm:$0xff]
      %v331 = vld [vmem:[%s1 + $0x48] sm:$0xff]
      %v332 = vld [vmem:[%s1 + $0x50] sm:$0xff]
      %v333 = vld [vmem:[%s1 + $0x58] sm:$0xff]
      %v334 = vld [vmem:[%s1 + $0x60] sm:$0xff]
      %v335 = vld [vmem:[%s1 + $0x68] sm:$0xff]
      %v336 = vld [vmem:[%s1 + $0x70] sm:$0xff]
      %v337 = vld [vmem:[%s1 + $0x78] sm:$0xff]
      %v338 = vld [vmem:[%s1 + $0x80] sm:$0xff]
      %v339 = vld [vmem:[%s1 + $0x88] sm:$0x1f]
      %vm340 = vcmask 105472
      %v342 = vsel %vm340, %v315, 0
      %v345 = vsel %vm340, %v317, 0
      %vm347 = vcmask 1044480
      %v349 = vsel %vm347, %v339, 0
      %351 = vmatprep.subr.mxu0 0.0
      %352 = vmatpush1.msra.mxu0 %v337
      %353 = vmatprep.subr.mxu0 0.0
      %354 = vmatpush1.msra.mxu0 %v336
      %355 = vmatprep.subr.mxu0 0.0
      %356 = vmatpush1.msra.mxu0 %v335
      %357 = vmatprep.subr.mxu0 0.0
      %358 = vmatpush1.msra.mxu0 %v334
      %359 = vmatprep.subr.mxu0 0.0
      %360 = vmatpush1.msra.mxu0 %v333
      %361 = vmatprep.subr.mxu0 0.0
      %362 = vmatpush1.msra.mxu0 %v332
      %363 = vmatprep.subr.mxu0 0.0
      %364 = vmatpush1.msra.mxu0 %v331
      %365 = vmatprep.subr.mxu0 0.0
      %366 = vmatpush1.msra.mxu0 %v330
      %367 = vmatprep.subr.mxu0 0.0
      %368 = vmatpush1.msra.mxu0 %v329
      %369 = vmatprep.subr.mxu0 0.0
      %370 = vmatpush1.msra.mxu0 %v328
      %371 = vmatprep.subr.mxu0 0.0
      %372 = vmatpush1.msra.mxu0 %v327
      %373 = vmatprep.subr.mxu0 0.0
      %374 = vmatpush1.msra.mxu0 %v326
      %375 = vmatprep.subr.mxu0 0.0
      %376 = vmatpush1.msra.mxu0 %v325
      %377 = vmatprep.subr.mxu0 0.0
      %378 = vmatpush1.msra.mxu0 %v324
      %379 = vmatprep.subr.mxu0 0.0
      %380 = vmatpush1.msra.mxu0 %v323
      %381 = vmatprep.subr.mxu0 0.0
      %382 = vmatpush1.msra.mxu0 %v322
      %383 = vmatprep.subr.mxu0 0.0
      %384 = vmatpush2.msra.mxu0 0.0
      %385 = vmatprep.subr.mxu0 0.0
      %386 = vmatpush2.msra.mxu0 0.0
      %387 = vmatprep.subr.mxu0 0.0
      %388 = vmatpush2.msra.mxu0 0.0
      %389 = vmatprep.subr.mxu0 0.0
      %390 = vmatpush2.msra.mxu0 0.0
      %391 = vmatprep.subr.mxu0 0.0
      %392 = vmatpush2.msra.mxu0 0.0
      %393 = vmatprep.subr.mxu0 0.0
      %394 = vmatpush2.msra.mxu0 0.0
      %395 = vmatprep.subr.mxu0 0.0
      %396 = vmatpush2.msra.mxu0 0.0
      %397 = vmatprep.subr.mxu0 0.0
      %398 = vmatpush2.msra.mxu0 0.0
      %399 = vmatprep.subr.mxu0 0.0
      %400 = vmatpush2.msra.mxu0 0.0
      %401 = vmatprep.subr.mxu0 0.0
      %402 = vmatpush2.msra.mxu0 0.0
      %403 = vmatprep.subr.mxu0 0.0
      %404 = vmatpush2.msra.mxu0 0.0
      %405 = vmatprep.subr.mxu0 0.0
      %406 = vmatpush2.msra.mxu0 0.0
      %407 = vmatprep.subr.mxu0 0.0
      %408 = vmatpush2.msra.mxu0 0.0
      %409 = vmatprep.subr.mxu0 0.0
      %410 = vmatpush2.msra.mxu0 0.0
      %411 = vmatprep.subr.mxu0 0.0
      %412 = vmatpush2.msra.mxu0 %v349
      %413 = vmatprep.subr.mxu0 0.0
      %414 = vmatpush2.msra.mxu0 %v338
      %415 = vmatprep.mubr.f32.mxu0 %v342
      %416 = vmatmul.mubr.f32.gmra.mxu0 %v314
      %v417 = vpop.f32.mrf.mxu0
      %v418 = vadd.f32 0.0, %v417
      %v419 = vpop.f32.mrf.mxu0
      %420 = vmatprep.mubr.f32.mxu0 %v345
      %421 = vmatmul.mubr.f32.gmra.mxu0 %v316
      %v422 = vpop.f32.mrf.mxu0
      %v423 = vadd.f32 0.0, %v422
      %v424 = vpop.f32.mrf.mxu0
      %425 = vdwg.mxu0
      %v426 = vld [vmem:[%s2] sm:$0xff]
      %v427 = vld [vmem:[%s2 + $0x8] sm:$0xff]
      %v428 = vld [vmem:[%s2 + $0x10] sm:$0xff]
      %v429 = vld [vmem:[%s2 + $0x18] sm:$0xff]
      %v430 = vld [vmem:[%s2 + $0x20] sm:$0xff]
      %v431 = vld [vmem:[%s2 + $0x28] sm:$0xff]
      %v432 = vld [vmem:[%s2 + $0x30] sm:$0xff]
      %v433 = vld [vmem:[%s2 + $0x38] sm:$0xff]
      %v434 = vld [vmem:[%s2 + $0x40] sm:$0xff]
      %v435 = vld [vmem:[%s2 + $0x48] sm:$0xff]
      %v436 = vld [vmem:[%s2 + $0x50] sm:$0xff]
      %v437 = vld [vmem:[%s2 + $0x58] sm:$0xff]
      %v438 = vld [vmem:[%s2 + $0x60] sm:$0xff]
      %v439 = vld [vmem:[%s2 + $0x68] sm:$0xff]
      %v440 = vld [vmem:[%s2 + $0x70] sm:$0xff]
      %v441 = vld [vmem:[%s2 + $0x78] sm:$0xff]
      %v442 = vld [vmem:[%s2 + $0x80] sm:$0xff]
      %v443 = vld [vmem:[%s2 + $0x88] sm:$0x1f]
      %v445 = vsel %vm340, %v319, 0
      %v448 = vsel %vm340, %v321, 0
      %v451 = vsel %vm347, %v443, 0
      %453 = vmatprep.subr.mxu0 0.0
      %454 = vmatpush1.msra.mxu0 %v441
      %455 = vmatprep.subr.mxu0 0.0
      %456 = vmatpush1.msra.mxu0 %v440
      %457 = vmatprep.subr.mxu0 0.0
      %458 = vmatpush1.msra.mxu0 %v439
      %459 = vmatprep.subr.mxu0 0.0
      %460 = vmatpush1.msra.mxu0 %v438
      %461 = vmatprep.subr.mxu0 0.0
      %462 = vmatpush1.msra.mxu0 %v437
      %463 = vmatprep.subr.mxu0 0.0
      %464 = vmatpush1.msra.mxu0 %v436
      %465 = vmatprep.subr.mxu0 0.0
      %466 = vmatpush1.msra.mxu0 %v435
      %467 = vmatprep.subr.mxu0 0.0
      %468 = vmatpush1.msra.mxu0 %v434
      %469 = vmatprep.subr.mxu0 0.0
      %470 = vmatpush1.msra.mxu0 %v433
      %471 = vmatprep.subr.mxu0 0.0
      %472 = vmatpush1.msra.mxu0 %v432
      %473 = vmatprep.subr.mxu0 0.0
      %474 = vmatpush1.msra.mxu0 %v431
      %475 = vmatprep.subr.mxu0 0.0
      %476 = vmatpush1.msra.mxu0 %v430
      %477 = vmatprep.subr.mxu0 0.0
      %478 = vmatpush1.msra.mxu0 %v429
      %479 = vmatprep.subr.mxu0 0.0
      %480 = vmatpush1.msra.mxu0 %v428
      %481 = vmatprep.subr.mxu0 0.0
      %482 = vmatpush1.msra.mxu0 %v427
      %483 = vmatprep.subr.mxu0 0.0
      %484 = vmatpush1.msra.mxu0 %v426
      %485 = vmatprep.subr.mxu0 0.0
      %486 = vmatpush2.msra.mxu0 0.0
      %487 = vmatprep.subr.mxu0 0.0
      %488 = vmatpush2.msra.mxu0 0.0
      %489 = vmatprep.subr.mxu0 0.0
      %490 = vmatpush2.msra.mxu0 0.0
      %491 = vmatprep.subr.mxu0 0.0
      %492 = vmatpush2.msra.mxu0 0.0
      %493 = vmatprep.subr.mxu0 0.0
      %494 = vmatpush2.msra.mxu0 0.0
      %495 = vmatprep.subr.mxu0 0.0
      %496 = vmatpush2.msra.mxu0 0.0
      %497 = vmatprep.subr.mxu0 0.0
      %498 = vmatpush2.msra.mxu0 0.0
      %499 = vmatprep.subr.mxu0 0.0
      %500 = vmatpush2.msra.mxu0 0.0
      %501 = vmatprep.subr.mxu0 0.0
      %502 = vmatpush2.msra.mxu0 0.0
      %503 = vmatprep.subr.mxu0 0.0
      %504 = vmatpush2.msra.mxu0 0.0
      %505 = vmatprep.subr.mxu0 0.0
      %506 = vmatpush2.msra.mxu0 0.0
      %507 = vmatprep.subr.mxu0 0.0
      %508 = vmatpush2.msra.mxu0 0.0
      %509 = vmatprep.subr.mxu0 0.0
      %510 = vmatpush2.msra.mxu0 0.0
      %511 = vmatprep.subr.mxu0 0.0
      %512 = vmatpush2.msra.mxu0 0.0
      %513 = vmatprep.subr.mxu0 0.0
      %514 = vmatpush2.msra.mxu0 %v451
      %515 = vmatprep.subr.mxu0 0.0
      %516 = vmatpush2.msra.mxu0 %v442
      %517 = vmatprep.mubr.f32.mxu0 %v445
      %518 = vmatmul.mubr.f32.gmra.mxu0 %v318
      %v519 = vpop.f32.mrf.mxu0
      %v520 = vadd.f32 0.0, %v519
      %v521 = vpop.f32.mrf.mxu0
      %522 = vmatprep.mubr.f32.mxu0 %v448
      %523 = vmatmul.mubr.f32.gmra.mxu0 %v320
      %v524 = vpop.f32.mrf.mxu0
      %v525 = vadd.f32 0.0, %v524
      %v526 = vpop.f32.mrf.mxu0
      %527 = vdwg.mxu0
      %v528 = vmul.f32 %v418, %v418
      %v529 = vmul.f32 %v423, %v423
      %532 = vrot.lane.b32.xlu0 %v520, 64
      %v533 = vpop.permute.xlu0 %532
      %534 = vrot.lane.b32.xlu0 %v525, 64
      %v535 = vpop.permute.xlu0 %534
      %v538 = vsub.f32 %v528, %v533
      %v539 = vsub.f32 %v529, %v535
      %542 = vrot.lane.b32.xlu0 %v538, 64
      %v543 = vpop.permute.xlu0 %542
      %544 = vrot.lane.b32.xlu0 %v539, 64
      %v545 = vpop.permute.xlu0 %544
      %vm548 = vcmask 64512
      %v549 = vsel %vm548, %v543, 0.0
      %550 = vadd.xlane.f32.xlu0 %v549
      %v551 = vpop.xlane.xlu0 %550
      %v552 = vsel %vm548, %v545, 0.0
      %553 = vadd.xlane.f32.xlu0 %v552
      %v554 = vpop.xlane.xlu0 %553
      %v555 = vmul.f32 %v551, 0.5
      %v556 = vmul.f32 %v554, 0.5
      %v557 = vld [vmem:[%s3] sm:$0x1]
      %v559 = vlaneseq
      %v560 = vshrl.u32 %v559, 7
      %v561 = vsub.s32 0, %v560
      %v562 = vrot.slane %v557, %v561
      %v564 = vadd.f32 %v418, %v562
      %v565 = vadd.f32 %v423, %v562
      %v566 = vmax.f32 %v564, 0.0
      %v567 = vmax.f32 %v565, 0.0
      %v568 = vld [vmem:[%s4] sm:$0xff]
      %v569 = vld [vmem:[%s4 + $0x8] sm:$0xff]
      %v570 = vld [vmem:[%s4 + $0x10] sm:$0xff]
      %v571 = vld [vmem:[%s4 + $0x18] sm:$0xff]
      %v572 = vld [vmem:[%s4 + $0x20] sm:$0xff]
      %v573 = vld [vmem:[%s4 + $0x28] sm:$0xff]
      %v574 = vld [vmem:[%s4 + $0x30] sm:$0xff]
      %v575 = vld [vmem:[%s4 + $0x38] sm:$0xff]
      %v576 = vld [vmem:[%s5] sm:$0x1]
      %v578 = vlaneseq
      %v579 = vshrl.u32 %v578, 7
      %v580 = vsub.s32 0, %v579
      %v581 = vrot.slane %v576, %v580
      %vm583 = vcmask 523264
      %v585 = vsel %vm583, %v566, 0
      %v588 = vsel %vm583, %v567, 0
      %590 = vmatprep.subr.mxu0 0.0
      %591 = vmatpush1.msra.mxu0 0.0
      %592 = vmatprep.subr.mxu0 0.0
      %593 = vmatpush1.msra.mxu0 0.0
      %594 = vmatprep.subr.mxu0 0.0
      %595 = vmatpush1.msra.mxu0 0.0
      %596 = vmatprep.subr.mxu0 0.0
      %597 = vmatpush1.msra.mxu0 0.0
      %598 = vmatprep.subr.mxu0 0.0
      %599 = vmatpush1.msra.mxu0 0.0
      %600 = vmatprep.subr.mxu0 0.0
      %601 = vmatpush1.msra.mxu0 0.0
      %602 = vmatprep.subr.mxu0 0.0
      %603 = vmatpush1.msra.mxu0 0.0
      %604 = vmatprep.subr.mxu0 0.0
      %605 = vmatpush1.msra.mxu0 0.0
      %606 = vmatprep.subr.mxu0 0.0
      %607 = vmatpush1.msra.mxu0 %v575
      %608 = vmatprep.subr.mxu0 0.0
      %609 = vmatpush1.msra.mxu0 %v574
      %610 = vmatprep.subr.mxu0 0.0
      %611 = vmatpush1.msra.mxu0 %v573
      %612 = vmatprep.subr.mxu0 0.0
      %613 = vmatpush1.msra.mxu0 %v572
      %614 = vmatprep.subr.mxu0 0.0
      %615 = vmatpush1.msra.mxu0 %v571
      %616 = vmatprep.subr.mxu0 0.0
      %617 = vmatpush1.msra.mxu0 %v570
      %618 = vmatprep.subr.mxu0 0.0
      %619 = vmatpush1.msra.mxu0 %v569
      %620 = vmatprep.subr.mxu0 0.0
      %621 = vmatpush1.msra.mxu0 %v568
      %622 = vmatprep.subr.mxu0 0.0
      %623 = vmatpush2.msra.mxu0 0.0
      %624 = vmatprep.subr.mxu0 0.0
      %625 = vmatpush2.msra.mxu0 0.0
      %626 = vmatprep.subr.mxu0 0.0
      %627 = vmatpush2.msra.mxu0 0.0
      %628 = vmatprep.subr.mxu0 0.0
      %629 = vmatpush2.msra.mxu0 0.0
      %630 = vmatprep.subr.mxu0 0.0
      %631 = vmatpush2.msra.mxu0 0.0
      %632 = vmatprep.subr.mxu0 0.0
      %633 = vmatpush2.msra.mxu0 0.0
      %634 = vmatprep.subr.mxu0 0.0
      %635 = vmatpush2.msra.mxu0 0.0
      %636 = vmatprep.subr.mxu0 0.0
      %637 = vmatpush2.msra.mxu0 0.0
      %638 = vmatprep.subr.mxu0 0.0
      %639 = vmatpush2.msra.mxu0 0.0
      %640 = vmatprep.subr.mxu0 0.0
      %641 = vmatpush2.msra.mxu0 0.0
      %642 = vmatprep.subr.mxu0 0.0
      %643 = vmatpush2.msra.mxu0 0.0
      %644 = vmatprep.subr.mxu0 0.0
      %645 = vmatpush2.msra.mxu0 0.0
      %646 = vmatprep.subr.mxu0 0.0
      %647 = vmatpush2.msra.mxu0 0.0
      %648 = vmatprep.subr.mxu0 0.0
      %649 = vmatpush2.msra.mxu0 0.0
      %650 = vmatprep.subr.mxu0 0.0
      %651 = vmatpush2.msra.mxu0 0.0
      %652 = vmatprep.subr.mxu0 0.0
      %653 = vmatpush2.msra.mxu0 0.0
      %654 = vmatprep.mubr.f32.mxu0 0.0
      %655 = vmatmul.mubr.f32.gmra.mxu0 %v585
      %v656 = vpop.f32.mrf.mxu0
      %v657 = vadd.f32 %v581, %v656
      %v658 = vpop.f32.mrf.mxu0
      %659 = vmatprep.mubr.f32.mxu0 0.0
      %660 = vmatmul.mubr.f32.gmra.mxu0 %v588
      %v661 = vpop.f32.mrf.mxu0
      %v662 = vadd.f32 %v581, %v661
      %v663 = vpop.f32.mrf.mxu0
      %664 = vdwg.mxu0
      %v665 = vmax.f32 %v657, 0.0
      %v666 = vmax.f32 %v662, 0.0
      %v667 = vld [vmem:[%s6] sm:$0x1]
      %v669 = vlaneseq
      %v670 = vshrl.u32 %v669, 7
      %v671 = vsub.s32 0, %v670
      %v672 = vrot.slane %v667, %v671
      %v674 = vmul.f32 %v665, %v672
      %v675 = vmul.f32 %v666, %v672
      %vm676 = vcmask 261120
      %v677 = vsel %vm676, %v674, 0.0
      %678 = vadd.xlane.f32.xlu0 %v677
      %v679 = vpop.xlane.xlu0 %678
      %v680 = vsel %vm676, %v675, 0.0
      %681 = vadd.xlane.f32.xlu0 %v680
      %v682 = vpop.xlane.xlu0 %681
      %v683 = vadd.f32 %v418, %v555
      %v684 = vadd.f32 %v423, %v556
      %v685 = vadd.f32 %v683, %v679
      %v686 = vadd.f32 %v684, %v682
      %v687 = vld [vmem:[#allocation2] sm:$0x1]
      %v689 = vlaneseq
      %v690 = vshrl.u32 %v689, 7
      %v691 = vsub.s32 0, %v690
      %v692 = vrot.slane %v687, %v691
      %693 = vrot.lane.b32.xlu0 %v692, 72
      %v694 = vpop.permute.xlu0 %693
      %v696 = vadd.f32 %v685, %v694
      %v697 = vadd.f32 %v686, %v694
      %700 = vrot.lane.b32.xlu0 %v696, 56
      %v701 = vpop.permute.xlu0 %700
      %702 = vrot.lane.b32.xlu0 %v697, 56
      %v703 = vpop.permute.xlu0 %702
      %vm706 = vcmask 7168
      %707 = vst.msk [vmem:[%s312] sm:$0xff] %vm706, %v701
      %708 = vst.msk [vmem:[%s312 + $0x8] sm:$0xff] %vm706, %v703
      %s709 = smul.u32 2, %s21
      %p710 = scmp.lt.s32.totalorder %s709, 5
      %s711 = scalar_select %p710, %s709, 5
      %s712 = smul.addr %s711, 8
      %s713 = scalar_lea.vmem %s8, %s712
      // Predicated region
      $region53: #{tpu_custom_call.1} parent=51 // pred_check
        %p714 = pneg %p212
      $region54: #{tpu_custom_call.1} parent=51 // pred_check_branch
        %716 = sbr.rel (%p714) target = $region56
      $region55: #{tpu_custom_call.1} parent=51 // pred_region
        %s717 = smul.u32 2, %s21
      $region56: #{tpu_custom_call.1} parent=51 // pred_fallthru
        _
    $region52: #{tpu_custom_call.1} parent=5 // pred_fallthru
      _
    %p718 = scmp.le.s32.totalorder 2, %s16
    // Predicated region
    $region57: #{tpu_custom_call.1} parent=5 // pred_check
      %p719 = pneg %p718
    $region58: #{tpu_custom_call.1} parent=5 // pred_check_branch
      %721 = sbr.rel (%p719) target = $region60
    $region59: #{tpu_custom_call.1} parent=5 // pred_region
      %s722 = ssub.s32 %s16, 2
      // Predicated region
      $region61: #{tpu_custom_call.1} parent=59 // pred_check
        %p723 = pneg %p218
      $region62: #{tpu_custom_call.1} parent=59 // pred_check_branch
        %725 = sbr.rel (%p723) target = $region64
      $region63: #{tpu_custom_call.1} parent=59 // pred_region
        %s726 = smul.u32 2, %s22
        %p727 = scmp.lt.s32.totalorder %s726, 5
        %s728 = scalar_select %p727, %s726, 5
        %s729 = smul.addr %s728, 8
        %s730 = scalar_lea.vmem %s8, %s729
      $region64: #{tpu_custom_call.1} parent=59 // pred_fallthru
        _
    $region60: #{tpu_custom_call.1} parent=5 // pred_fallthru
      _
  $region6: #{tpu_custom_call.1} parent=0 // loop_footer
    %s20 = sadd.s32 1, %s16
  $region7: #{tpu_custom_call.1} parent=0 // loop_footer_branch
    %15 = sbr.rel target = $region3
  $region8: #{tpu_custom_call.1} parent=0 // loop_exit
    _

</llo_original>
